<compile_context>
chip_gen: v7x
topology: tpu7x:2x2x1
jax: 0.10.0
libtpu: 0.0.40
codegen_flags: <defaults>
</compile_context>

<pallas_src>
import functools

import jax
import jax.numpy as jnp
from jax.experimental import pallas as pl
from jax.experimental.pallas import tpu as pltpu


def _elu(x):
    # ELU(alpha=1).  Negative branch via the exact identity
    #   expm1(x) = tanh(x/2) * (exp(x) + 1)
    # -> no exp(x)-1 cancellation for small |x| (tracks PyTorch's expm1 ELU),
    # and only uses tanh/exp which lower to the EUP (free slot in this
    # mem-bound kernel).  min() keeps the unselected branch finite.
    xn = jnp.minimum(x, 0.0)
    neg = jnp.tanh(0.5 * xn) * (jnp.exp(xn) + 1.0)
    return jnp.where(x > 0, x, neg)


def _critic_kernel(s_ref, a_ref,
                   w1_ref, b1_ref,
                   w2s_ref, w2a_ref, b2_ref,
                   w3_ref, b3_ref,
                   out_ref, *, compute_dtype):
    cdt = compute_dtype

    # ---- layer 1: h1^T = ELU(W1 @ states^T + b1)                 (H1, TN) ----
    # States arrive in natural (TN, S) row layout; contract both operands on S
    # (A @ B^T form) so the batch lands on the lane axis with no transpose.
    # The bf16 cast happens here, in-kernel, not as a separate XLA pass.
    s = s_ref[...].astype(cdt)
    z1 = jax.lax.dot_general(
        w1_ref[...], s,
        dimension_numbers=(((1,), (1,)), ((), ())),
        preferred_element_type=jnp.float32)
    h1 = _elu(z1 + b1_ref[...])                       # b1: (H1, 1) bcast over lanes

    # ---- layer 2: z2^T = W2s @ h1^T + W2a @ actions^T + b2        (H2, TN) ----
    z2 = jnp.dot(w2s_ref[...], h1.astype(cdt),
                 preferred_element_type=jnp.float32)
    a = a_ref[...].astype(cdt)                        # (TN, A), natural layout
    z2 = z2 + jax.lax.dot_general(                    # K = A (tiny) -> MXU has slack
        w2a_ref[...], a,
        dimension_numbers=(((1,), (1,)), ((), ())),
        preferred_element_type=jnp.float32)
    h2 = _elu(z2 + b2_ref[...])

    # ---- output layer: 1-wide matmul -> VPU multiply + sublane (XLU) reduce ----
    out = jnp.sum(h2 * w3_ref[...], axis=0, keepdims=True) + b3_ref[0, 0]
    out_ref[...] = out.astype(out_ref.dtype)          # (1, TN): lane-dense store


def _round_up(x, m):
    return (x + m - 1) // m * m


def critic_forward(full_states, full_actions, prepared, *,
                   tile_n=8192, min_programs=2):
    """Critic forward pass with a batch-tiled Pallas kernel.

    full_states:  (B, in_size)       f32 or bf16 (used as-is; bf16 cast, if any,
                                     happens inside the kernel)
    full_actions: (B, action_size)   f32 or bf16
    prepared:     output of prepare_critic_params (weights already in the
                  compute dtype, so no per-call cast HLOs)
    returns:      (B, 1) float32
    """
    B, S = full_states.shape
    _, A = full_actions.shape
    H1 = prepared["w1"].shape[0]
    H2 = prepared["w2s"].shape[0]
    cdt = prepared["w1"].dtype

    # Tile selection: pad each tile only to 128 (Pallas handles the ragged last
    # block), and guarantee >= min_programs grid steps when B > 128 so the
    # "parallel" batch axis actually shards across v7x's two TensorCores.  The
    # extra grid step is ~0.35 us on single-TC chips -> negligible.
    n_tiles = max(1, pl.cdiv(B, tile_n))
    if B > 128 and n_tiles < min_programs:
        n_tiles = min_programs
    tn = max(128, _round_up(pl.cdiv(B, n_tiles), 128))
    grid = (pl.cdiv(B, tn),)

    kernel = functools.partial(_critic_kernel, compute_dtype=cdt)

    out = pl.pallas_call(
        kernel,
        out_shape=jax.ShapeDtypeStruct((1, B), jnp.float32),
        grid=grid,
        in_specs=[
            pl.BlockSpec((tn, S), lambda i: (i, 0)),        # states rows (pipelined)
            pl.BlockSpec((tn, A), lambda i: (i, 0)),        # actions rows (pipelined)
            pl.BlockSpec((H1, S), lambda i: (0, 0)),        # w1   (VMEM-resident)
            pl.BlockSpec((H1, 1), lambda i: (0, 0)),        # b1
            pl.BlockSpec((H2, H1), lambda i: (0, 0)),       # w2s
            pl.BlockSpec((H2, A), lambda i: (0, 0)),        # w2a
            pl.BlockSpec((H2, 1), lambda i: (0, 0)),        # b2
            pl.BlockSpec((H2, 1), lambda i: (0, 0)),        # w3 (column)
            pl.BlockSpec(memory_space=pltpu.MemorySpace.SMEM),  # b3 scalar in SMEM
        ],
        out_specs=pl.BlockSpec((1, tn), lambda i: (0, i)),  # lane-dense output row
        compiler_params=pltpu.CompilerParams(
            dimension_semantics=("parallel",),              # shards across v7x's 2 TCs
            vmem_limit_bytes=32 * 1024 * 1024,              # documents the ~16 MiB budget;
        ),                                                  # raises v5e's 16 MiB default
    )(full_states, full_actions,
      prepared["w1"], prepared["b1"],
      prepared["w2s"], prepared["w2a"], prepared["b2"],
      prepared["w3"], prepared["b3"])

    # (1, B) -> (B, 1); single cheap reshape to match the PyTorch signature.
    return out.reshape(B, 1)


def prepare_critic_params(params, use_bf16=True):
    """One-time conversion to the kernel's layout / compute dtype.

    Done once outside the per-call path so critic_forward emits no cast HLOs.
    bf16 MXU operands are the fast path on v5e/v6e/v7x alike (the MXU takes
    bf16 natively on all three); ELU and accumulation stay f32 in-kernel.
    """
    cdt = jnp.bfloat16 if use_bf16 else jnp.float32
    return dict(
        w1=params["w1"].astype(cdt),            # (H1, S)
        b1=params["b1"].astype(jnp.float32),    # (H1, 1)
        w2s=params["w2s"].astype(cdt),          # (H2, H1)
        w2a=params["w2a"].astype(cdt),          # (H2, A)
        b2=params["b2"].astype(jnp.float32),    # (H2, 1)
        w3=params["w3"].astype(jnp.float32),    # (H2, 1)
        b3=params["b3"].astype(jnp.float32),    # (1, 1)  -> SMEM scalar
    )


def make_critic_params(key, in_size, full_action_size, hidden_units=(64, 32)):
    """Deterministic init mirroring the PyTorch module's __init__.

    Weights are stored in PyTorch (out_features, in_features) layout, which is
    exactly what the transposed-dataflow kernel consumes.  fc_body uses the
    default nn.Linear init; critic_body Linears use _layer_init (lim based on
    weight.size(0), bias = 0, last layer scaled by 0.003).
    """
    h1, h2 = hidden_units
    k1, k2, k3, k4 = jax.random.split(key, 4)

    # fc_body: default nn.Linear init, uniform +-1/sqrt(in_size)
    lim1 = 1.0 / jnp.sqrt(jnp.float32(in_size))
    w1 = jax.random.uniform(k1, (h1, in_size), jnp.float32, -lim1, lim1)
    b1 = jax.random.uniform(k2, (h1, 1), jnp.float32, -lim1, lim1)

    # critic_body layer 1: _layer_init, fan_in = weight.size(0) = out_features = h2
    lim2 = 1.0 / jnp.sqrt(jnp.float32(h2))
    w2 = jax.random.uniform(k3, (h2, h1 + full_action_size), jnp.float32, -lim2, lim2)
    w2s = w2[:, :h1]                 # multiplies the h1 part of the concat
    w2a = w2[:, h1:]                 # multiplies the full_actions part
    b2 = jnp.zeros((h2, 1), jnp.float32)

    # critic_body output layer: _layer_init(_, 0.003), fan_in = weight.size(0) = 1
    w3 = jax.random.uniform(k4, (1, h2), jnp.float32, -1.0, 1.0) * 0.003
    w3 = w3.T                        # stored as (h2, 1) column for the sublane reduce
    b3 = jnp.zeros((1, 1), jnp.float32)

    return dict(w1=w1, b1=b1, w2s=w2s, w2a=w2a, b2=b2, w3=w3, b3=b3)


def critic_reference(full_states, full_actions, params, compute_dtype=jnp.float32):
    """Pure-JAX reference (optionally emulating the bf16-operand MXU path)."""
    cd = compute_dtype
    z1 = jnp.dot(full_states.astype(cd), params["w1"].T.astype(cd),
                 preferred_element_type=jnp.float32) + params["b1"][:, 0]
    h1 = jnp.where(z1 > 0, z1, jnp.expm1(z1))
    z2 = (jnp.dot(h1.astype(cd), params["w2s"].T.astype(cd),
                  preferred_element_type=jnp.float32)
          + jnp.dot(full_actions.astype(cd), params["w2a"].T.astype(cd),
                    preferred_element_type=jnp.float32)
          + params["b2"][:, 0])
    h2 = jnp.where(z2 > 0, z2, jnp.expm1(z2))
    return h2 @ params["w3"] + params["b3"][0, 0]


if __name__ == "__main__":
    key = jax.random.PRNGKey(0)
    k_params, k_states, k_actions = jax.random.split(key, 3)

    in_size, full_action_size = 48, 4
    hidden_units = (64, 32)
    params = make_critic_params(k_params, in_size, full_action_size, hidden_units)

    # --- f32 path, single tile (B=8), tight tolerance ------------------------
    params_f32 = prepare_critic_params(params, use_bf16=False)
    batch = 8
    full_states = jax.random.normal(k_states, (batch, in_size), jnp.float32)
    full_actions = jax.random.normal(k_actions, (batch, full_action_size), jnp.float32)

    out = jax.block_until_ready(critic_forward(full_states, full_actions, params_f32))
    ref = critic_reference(full_states, full_actions, params)
    assert out.shape == (batch, 1)
    assert jnp.allclose(out, ref, atol=3e-5, rtol=1e-4)

    # --- f32 path, multi-tile grid with a ragged last tile: B=300, tn=128 -> grid=(3,)
    k_s2, k_a2 = jax.random.split(jax.random.PRNGKey(1))
    batch2 = 300
    states2 = jax.random.normal(k_s2, (batch2, in_size), jnp.float32)
    actions2 = jax.random.normal(k_a2, (batch2, full_action_size), jnp.float32)

    out2 = jax.block_until_ready(
        critic_forward(states2, actions2, params_f32, tile_n=128))
    ref2 = critic_reference(states2, actions2, params)
    assert out2.shape == (batch2, 1)
    assert jnp.allclose(out2, ref2, atol=3e-5, rtol=1e-4)

    # --- bf16 MXU-operand path (default), >=2 programs (v7x 2-TC sharding path)
    params_bf16 = prepare_critic_params(params, use_bf16=True)
    k_s3, k_a3 = jax.random.split(jax.random.PRNGKey(2))
    batch3 = 512
    states3 = jax.random.normal(k_s3, (batch3, in_size), jnp.float32)
    actions3 = jax.random.normal(k_a3, (batch3, full_action_size), jnp.float32)

    out3 = jax.block_until_ready(
        critic_forward(states3, actions3, params_bf16))   # tn=256, grid=(2,)
    ref3 = critic_reference(states3, actions3, params, compute_dtype=jnp.bfloat16)
    assert out3.shape == (batch3, 1)
    assert jnp.allclose(out3, ref3, atol=2e-3, rtol=1e-2)

    print("KERNEL_OK")
</pallas_src>

<mosaic_0001>
module attributes {stable_mosaic.version = 11 : i64} {
  func.func @_critic_kernel(%arg0: i32, %arg1: memref<128x48xf32, #tpu.memory_space<vmem>>, %arg2: memref<128x4xf32, #tpu.memory_space<vmem>>, %arg3: memref<64x48xf32, #tpu.memory_space<vmem>>, %arg4: memref<64x1xf32, #tpu.memory_space<vmem>>, %arg5: memref<32x64xf32, #tpu.memory_space<vmem>>, %arg6: memref<32x4xf32, #tpu.memory_space<vmem>>, %arg7: memref<32x1xf32, #tpu.memory_space<vmem>>, %arg8: memref<32x1xf32, #tpu.memory_space<vmem>>, %arg9: memref<1x1xf32, #tpu.memory_space<smem>>, %arg10: memref<1x128xf32, #tpu.memory_space<vmem>>) attributes {dimension_semantics = [#tpu.dimension_semantics<parallel>], iteration_bounds = array<i64: 1>, scalar_prefetch = 0 : i64, scratch_operands = 0 : i64, tpu.core_type = #tpu.core_type<tc>, window_params = [{transform_indices = @transform_0, window_bounds = array<i64: 128, 48>}, {transform_indices = @transform_1, window_bounds = array<i64: 128, 4>}, {pipeline_mode = #tpu.pipeline_mode<synchronous>, transform_indices = @transform_2, window_bounds = array<i64: 64, 48>}, {pipeline_mode = #tpu.pipeline_mode<synchronous>, transform_indices = @transform_3, window_bounds = array<i64: 64, 1>}, {pipeline_mode = #tpu.pipeline_mode<synchronous>, transform_indices = @transform_4, window_bounds = array<i64: 32, 64>}, {pipeline_mode = #tpu.pipeline_mode<synchronous>, transform_indices = @transform_5, window_bounds = array<i64: 32, 4>}, {pipeline_mode = #tpu.pipeline_mode<synchronous>, transform_indices = @transform_6, window_bounds = array<i64: 32, 1>}, {pipeline_mode = #tpu.pipeline_mode<synchronous>, transform_indices = @transform_7, window_bounds = array<i64: 32, 1>}, {transform_indices = @transform_8, window_bounds = array<i64: 1, 1>}, {transform_indices = @transform_9, window_bounds = array<i64: 1, 128>}]} {
    %c0 = arith.constant 0 : index
    %c0_0 = arith.constant 0 : index
    %0 = vector.load %arg1[%c0, %c0_0] : memref<128x48xf32, #tpu.memory_space<vmem>>, vector<128x48xf32>
    %c0_1 = arith.constant 0 : index
    %c0_2 = arith.constant 0 : index
    %1 = vector.load %arg3[%c0_1, %c0_2] : memref<64x48xf32, #tpu.memory_space<vmem>>, vector<64x48xf32>
    %cst = arith.constant dense<0.000000e+00> : vector<64x128xf32>
    %2 = tpu.matmul %1, %0, %cst {dimension_numbers = #tpu.dot_dimension_numbers<[1], [1], [0], [0], [0, 0, 1, 0], [], []>} : vector<64x48xf32>, vector<128x48xf32>, vector<64x128xf32> -> vector<64x128xf32>
    %c0_3 = arith.constant 0 : index
    %c0_4 = arith.constant 0 : index
    %3 = vector.load %arg4[%c0_3, %c0_4] : memref<64x1xf32, #tpu.memory_space<vmem>>, vector<64x1xf32>
    %4 = vector.broadcast %3 : vector<64x1xf32> to vector<64x128xf32>
    %5 = arith.addf %2, %4 : vector<64x128xf32>
    %cst_5 = arith.constant 0.000000e+00 : f32
    %6 = vector.broadcast %cst_5 : f32 to vector<64x128xf32>
    %7 = arith.minimumf %5, %6 : vector<64x128xf32>
    %cst_6 = arith.constant 5.000000e-01 : f32
    %8 = vector.broadcast %cst_6 : f32 to vector<64x128xf32>
    %9 = arith.mulf %8, %7 : vector<64x128xf32>
    %10 = math.tanh %9 : vector<64x128xf32>
    %11 = math.exp %7 : vector<64x128xf32>
    %cst_7 = arith.constant 1.000000e+00 : f32
    %12 = vector.broadcast %cst_7 : f32 to vector<64x128xf32>
    %13 = arith.addf %11, %12 : vector<64x128xf32>
    %14 = arith.mulf %10, %13 : vector<64x128xf32>
    %cst_8 = arith.constant 0.000000e+00 : f32
    %15 = vector.broadcast %cst_8 : f32 to vector<64x128xf32>
    %16 = arith.cmpf ogt, %5, %15 : vector<64x128xf32>
    %17 = arith.select %16, %5, %14 : vector<64x128xi1>, vector<64x128xf32>
    %c0_9 = arith.constant 0 : index
    %c0_10 = arith.constant 0 : index
    %18 = vector.load %arg5[%c0_9, %c0_10] : memref<32x64xf32, #tpu.memory_space<vmem>>, vector<32x64xf32>
    %cst_11 = arith.constant dense<0.000000e+00> : vector<32x128xf32>
    %19 = tpu.matmul %18, %17, %cst_11 {dimension_numbers = #tpu.dot_dimension_numbers<[1], [0], [0], [1], [0, 0, 1, 1], [], []>} : vector<32x64xf32>, vector<64x128xf32>, vector<32x128xf32> -> vector<32x128xf32>
    %c0_12 = arith.constant 0 : index
    %c0_13 = arith.constant 0 : index
    %20 = vector.load %arg2[%c0_12, %c0_13] : memref<128x4xf32, #tpu.memory_space<vmem>>, vector<128x4xf32>
    %c0_14 = arith.constant 0 : index
    %c0_15 = arith.constant 0 : index
    %21 = vector.load %arg6[%c0_14, %c0_15] : memref<32x4xf32, #tpu.memory_space<vmem>>, vector<32x4xf32>
    %cst_16 = arith.constant dense<0.000000e+00> : vector<32x128xf32>
    %22 = tpu.matmul %21, %20, %cst_16 {dimension_numbers = #tpu.dot_dimension_numbers<[1], [1], [0], [0], [0, 0, 1, 0], [], []>} : vector<32x4xf32>, vector<128x4xf32>, vector<32x128xf32> -> vector<32x128xf32>
    %23 = arith.addf %19, %22 : vector<32x128xf32>
    %c0_17 = arith.constant 0 : index
    %c0_18 = arith.constant 0 : index
    %24 = vector.load %arg7[%c0_17, %c0_18] : memref<32x1xf32, #tpu.memory_space<vmem>>, vector<32x1xf32>
    %25 = vector.broadcast %24 : vector<32x1xf32> to vector<32x128xf32>
    %26 = arith.addf %23, %25 : vector<32x128xf32>
    %cst_19 = arith.constant 0.000000e+00 : f32
    %27 = vector.broadcast %cst_19 : f32 to vector<32x128xf32>
    %28 = arith.minimumf %26, %27 : vector<32x128xf32>
    %cst_20 = arith.constant 5.000000e-01 : f32
    %29 = vector.broadcast %cst_20 : f32 to vector<32x128xf32>
    %30 = arith.mulf %29, %28 : vector<32x128xf32>
    %31 = math.tanh %30 : vector<32x128xf32>
    %32 = math.exp %28 : vector<32x128xf32>
    %cst_21 = arith.constant 1.000000e+00 : f32
    %33 = vector.broadcast %cst_21 : f32 to vector<32x128xf32>
    %34 = arith.addf %32, %33 : vector<32x128xf32>
    %35 = arith.mulf %31, %34 : vector<32x128xf32>
    %cst_22 = arith.constant 0.000000e+00 : f32
    %36 = vector.broadcast %cst_22 : f32 to vector<32x128xf32>
    %37 = arith.cmpf ogt, %26, %36 : vector<32x128xf32>
    %38 = arith.select %37, %26, %35 : vector<32x128xi1>, vector<32x128xf32>
    %c0_23 = arith.constant 0 : index
    %c0_24 = arith.constant 0 : index
    %39 = vector.load %arg8[%c0_23, %c0_24] : memref<32x1xf32, #tpu.memory_space<vmem>>, vector<32x1xf32>
    %40 = vector.broadcast %39 : vector<32x1xf32> to vector<32x128xf32>
    %41 = arith.mulf %38, %40 : vector<32x128xf32>
    %cst_25 = arith.constant dense<0.000000e+00> : vector<128xf32>
    %42 = vector.multi_reduction <add>, %41, %cst_25 [0] : vector<32x128xf32> to vector<128xf32>
    %43 = vector.shape_cast %42 : vector<128xf32> to vector<1x128xf32>
    %c0_26 = arith.constant 0 : index
    %c0_27 = arith.constant 0 : index
    %44 = memref.load %arg9[%c0_26, %c0_27] : memref<1x1xf32, #tpu.memory_space<smem>>
    %45 = vector.broadcast %44 : f32 to vector<1x128xf32>
    %46 = arith.addf %43, %45 : vector<1x128xf32>
    %c0_28 = arith.constant 0 : index
    %c0_29 = arith.constant 0 : index
    %47 = vector.load %arg10[%c0_28, %c0_29] : memref<1x128xf32, #tpu.memory_space<vmem>>, vector<1x128xf32>
    tpu.vector_store %arg10[%c0_28, %c0_29], %46 {strides = array<i32>} : memref<1x128xf32, #tpu.memory_space<vmem>>, vector<1x128xf32>,
    return
  }
  func.func @transform_0(%arg0: i32) -> (i32, i32) {
    %c0_i32 = arith.constant 0 : i32
    %c0_i32_0 = arith.constant 0 : i32
    return %arg0, %c0_i32 : i32, i32
  }
  func.func @transform_1(%arg0: i32) -> (i32, i32) {
    %c0_i32 = arith.constant 0 : i32
    %c0_i32_0 = arith.constant 0 : i32
    return %arg0, %c0_i32 : i32, i32
  }
  func.func @transform_2(%arg0: i32) -> (i32, i32) {
    %c0_i32 = arith.constant 0 : i32
    %c0_i32_0 = arith.constant 0 : i32
    %c0_i32_1 = arith.constant 0 : i32
    return %c0_i32, %c0_i32_0 : i32, i32
  }
  func.func @transform_3(%arg0: i32) -> (i32, i32) {
    %c0_i32 = arith.constant 0 : i32
    %c0_i32_0 = arith.constant 0 : i32
    %c0_i32_1 = arith.constant 0 : i32
    return %c0_i32, %c0_i32_0 : i32, i32
  }
  func.func @transform_4(%arg0: i32) -> (i32, i32) {
    %c0_i32 = arith.constant 0 : i32
    %c0_i32_0 = arith.constant 0 : i32
    %c0_i32_1 = arith.constant 0 : i32
    return %c0_i32, %c0_i32_0 : i32, i32
  }
  func.func @transform_5(%arg0: i32) -> (i32, i32) {
    %c0_i32 = arith.constant 0 : i32
    %c0_i32_0 = arith.constant 0 : i32
    %c0_i32_1 = arith.constant 0 : i32
    return %c0_i32, %c0_i32_0 : i32, i32
  }
  func.func @transform_6(%arg0: i32) -> (i32, i32) {
    %c0_i32 = arith.constant 0 : i32
    %c0_i32_0 = arith.constant 0 : i32
    %c0_i32_1 = arith.constant 0 : i32
    return %c0_i32, %c0_i32_0 : i32, i32
  }
  func.func @transform_7(%arg0: i32) -> (i32, i32) {
    %c0_i32 = arith.constant 0 : i32
    %c0_i32_0 = arith.constant 0 : i32
    %c0_i32_1 = arith.constant 0 : i32
    return %c0_i32, %c0_i32_0 : i32, i32
  }
  func.func @transform_8(%arg0: i32) -> (i32, i32) {
    %c0_i32 = arith.constant 0 : i32
    %c0_i32_0 = arith.constant 0 : i32
    %c0_i32_1 = arith.constant 0 : i32
    return %c0_i32, %c0_i32_0 : i32, i32
  }
  func.func @transform_9(%arg0: i32) -> (i32, i32) {
    %c0_i32 = arith.constant 0 : i32
    %c0_i32_0 = arith.constant 0 : i32
    return %c0_i32, %arg0 : i32, i32
  }
}

</mosaic_0001>

<llo_original>
// kernel: tpu_custom_call.1
$region0: #{tpu_custom_call.1}
  #allocation0 [shape = 'u32[]', space=smem, size = 0x4, offset = 0x4, fixed_abs, tag = 'smem constant byte address 0x4 - core index']
  #allocation1 [shape = 'u32[144,128]{1,0:T(1,128)}', space=vmem, size = 0x12000, scoped, tag = 'internal scratch']
  #allocation2 [shape = 'f32[1,1]{1,0:T(1,128)S(6)}', space=smem, size = 0x200, scoped, tag = 'scoped memory for tpu_custom_call.1']
  %s0 = inlined_call_operand.vmem [shape: f32[8,48], index: 0, kind: input, shape index: {}]
  %s1 = inlined_call_operand.vmem [shape: f32[8,4], index: 1, kind: input, shape index: {}]
  %s2 = inlined_call_operand.vmem [shape: f32[64,48], index: 2, kind: input, shape index: {}]
  %s3 = inlined_call_operand.vmem [shape: f32[64,1], index: 3, kind: input, shape index: {}]
  %s4 = inlined_call_operand.vmem [shape: f32[32,64], index: 4, kind: input, shape index: {}]
  %s5 = inlined_call_operand.vmem [shape: f32[32,4], index: 5, kind: input, shape index: {}]
  %s6 = inlined_call_operand.vmem [shape: f32[32,1], index: 6, kind: input, shape index: {}]
  %s7 = inlined_call_operand.vmem [shape: f32[32,1], index: 7, kind: input, shape index: {}]
  %s8 = inlined_call_operand.<no memory space> [shape: f32[1,1], index: 8, kind: input, shape index: {}]
  %s9 = inlined_call_operand.hbm [shape: f32[1,8], index: 9, kind: output, shape index: {}]
  %s10 = sld [smem:[#allocation0]]
  $region46: #{tpu_custom_call.1} parent=0
    _
  %s12 = ssub.s32 1, %s10
  %s13 = scalar_select 0, %s12, %s10
  %14 = sst [smem:[#allocation2]] %s8
  $region1: #{tpu_custom_call.1} parent=0
    #allocation3 [shape = 'u8[512]{0}', space=vmem, size = 0x400, scoped, tag = 'output window, operand 0, single buffered']
    #allocation4 [shape = 's32[1]{0}', space=sflag, size = 0x4, scoped, tag = 'scoped memory for tpu_custom_call.1']
    %15 = vsyncpa [#allocation4], 0
    // Predicated region
    $region2: #{tpu_custom_call.1} parent=1 // pred_check
      _
    $region3: #{tpu_custom_call.1} parent=1 // pred_check_branch
      %17 = sbr.rel (0) target = $region5
    $region4: #{tpu_custom_call.1} parent=1 // pred_region
      _
    $region5: #{tpu_custom_call.1} parent=1 // pred_fallthru
      _
    // Predicated region
    $region6: #{tpu_custom_call.1} parent=1 // pred_check
      _
    $region7: #{tpu_custom_call.1} parent=1 // pred_check_branch
      %19 = sbr.rel (0) target = $region9
    $region8: #{tpu_custom_call.1} parent=1 // pred_region
      _
    $region9: #{tpu_custom_call.1} parent=1 // pred_fallthru
      _
    // Predicated region
    $region10: #{tpu_custom_call.1} parent=1 // pred_check
      _
    $region11: #{tpu_custom_call.1} parent=1 // pred_check_branch
      %21 = sbr.rel (0) target = $region13
    $region12: #{tpu_custom_call.1} parent=1 // pred_region
      _
    $region13: #{tpu_custom_call.1} parent=1 // pred_fallthru
      _
    // Predicated region
    $region14: #{tpu_custom_call.1} parent=1 // pred_check
      _
    $region15: #{tpu_custom_call.1} parent=1 // pred_check_branch
      %23 = sbr.rel (0) target = $region17
    $region16: #{tpu_custom_call.1} parent=1 // pred_region
      _
    $region17: #{tpu_custom_call.1} parent=1 // pred_fallthru
      _
    // Predicated region
    $region18: #{tpu_custom_call.1} parent=1 // pred_check
      _
    $region19: #{tpu_custom_call.1} parent=1 // pred_check_branch
      %25 = sbr.rel (0) target = $region21
    $region20: #{tpu_custom_call.1} parent=1 // pred_region
      _
    $region21: #{tpu_custom_call.1} parent=1 // pred_fallthru
      _
    // Predicated region
    $region22: #{tpu_custom_call.1} parent=1 // pred_check
      _
    $region23: #{tpu_custom_call.1} parent=1 // pred_check_branch
      %27 = sbr.rel (0) target = $region25
    $region24: #{tpu_custom_call.1} parent=1 // pred_region
      _
    $region25: #{tpu_custom_call.1} parent=1 // pred_fallthru
      _
    // Predicated region
    $region26: #{tpu_custom_call.1} parent=1 // pred_check
      _
    $region27: #{tpu_custom_call.1} parent=1 // pred_check_branch
      %29 = sbr.rel (0) target = $region29
    $region28: #{tpu_custom_call.1} parent=1 // pred_region
      _
    $region29: #{tpu_custom_call.1} parent=1 // pred_fallthru
      _
    // Predicated region
    $region30: #{tpu_custom_call.1} parent=1 // pred_check
      _
    $region31: #{tpu_custom_call.1} parent=1 // pred_check_branch
      %31 = sbr.rel (0) target = $region33
    $region32: #{tpu_custom_call.1} parent=1 // pred_region
      _
    $region33: #{tpu_custom_call.1} parent=1 // pred_fallthru
      _
    // Predicated region
    $region34: #{tpu_custom_call.1} parent=1 // pred_check
      _
    $region35: #{tpu_custom_call.1} parent=1 // pred_check_branch
      %33 = sbr.rel (0) target = $region37
    $region36: #{tpu_custom_call.1} parent=1 // pred_region
      _
    $region37: #{tpu_custom_call.1} parent=1 // pred_fallthru
      _
    %v34 = vld [vmem:[%s0] sm:$0xff]
    %v35 = vld [vmem:[%s0 + $0x8] sm:$0xff]
    %v36 = vld [vmem:[%s0 + $0x10] sm:$0xff]
    %v37 = vld [vmem:[%s0 + $0x18] sm:$0xff]
    %v38 = vld [vmem:[%s0 + $0x20] sm:$0xff]
    %v39 = vld [vmem:[%s0 + $0x28] sm:$0xff]
    %v40 = vld [vmem:[%s0 + $0x30] sm:$0xff]
    %v41 = vld [vmem:[%s0 + $0x38] sm:$0xff]
    %v42 = vld [vmem:[%s0 + $0x40] sm:$0xff]
    %v43 = vld [vmem:[%s0 + $0x48] sm:$0xff]
    %v44 = vld [vmem:[%s0 + $0x50] sm:$0xff]
    %v45 = vld [vmem:[%s0 + $0x58] sm:$0xff]
    %v46 = vld [vmem:[%s0 + $0x60] sm:$0xff]
    %v47 = vld [vmem:[%s0 + $0x68] sm:$0xff]
    %v48 = vld [vmem:[%s0 + $0x70] sm:$0xff]
    %v49 = vld [vmem:[%s0 + $0x78] sm:$0xff]
    %v50 = vld [vmem:[%s2] sm:$0xff]
    %v51 = vld [vmem:[%s2 + $0x8] sm:$0xff]
    %v52 = vld [vmem:[%s2 + $0x10] sm:$0xff]
    %v53 = vld [vmem:[%s2 + $0x18] sm:$0xff]
    %v54 = vld [vmem:[%s2 + $0x20] sm:$0xff]
    %v55 = vld [vmem:[%s2 + $0x28] sm:$0xff]
    %v56 = vld [vmem:[%s2 + $0x30] sm:$0xff]
    %v57 = vld [vmem:[%s2 + $0x38] sm:$0xff]
    %v58 = vld [vmem:[%s3] sm:$0xff]
    %v59 = vld [vmem:[%s3 + $0x8] sm:$0xff]
    %v60 = vld [vmem:[%s3 + $0x10] sm:$0xff]
    %v61 = vld [vmem:[%s3 + $0x18] sm:$0xff]
    %v62 = vld [vmem:[%s3 + $0x20] sm:$0xff]
    %v63 = vld [vmem:[%s3 + $0x28] sm:$0xff]
    %v64 = vld [vmem:[%s3 + $0x30] sm:$0xff]
    %v65 = vld [vmem:[%s3 + $0x38] sm:$0xff]
    %67 = vset.pattern.permute.xlu0 0
    %68 = vperm.xlu0 %67, %v58
    %v69 = vpop.permute.xlu0 %68
    %72 = vset.pattern.permute.xlu0 0
    %73 = vperm.xlu0 %72, %v59
    %v74 = vpop.permute.xlu0 %73
    %77 = vset.pattern.permute.xlu0 0
    %78 = vperm.xlu0 %77, %v60
    %v79 = vpop.permute.xlu0 %78
    %82 = vset.pattern.permute.xlu0 0
    %83 = vperm.xlu0 %82, %v61
    %v84 = vpop.permute.xlu0 %83
    %87 = vset.pattern.permute.xlu0 0
    %88 = vperm.xlu0 %87, %v62
    %v89 = vpop.permute.xlu0 %88
    %92 = vset.pattern.permute.xlu0 0
    %93 = vperm.xlu0 %92, %v63
    %v94 = vpop.permute.xlu0 %93
    %97 = vset.pattern.permute.xlu0 0
    %98 = vperm.xlu0 %97, %v64
    %v99 = vpop.permute.xlu0 %98
    %102 = vset.pattern.permute.xlu0 0
    %103 = vperm.xlu0 %102, %v65
    %v104 = vpop.permute.xlu0 %103
    %vm106 = vcmask 392192
    %v108 = vsel %vm106, %v50, 0
    %v111 = vsel %vm106, %v51, 0
    %v114 = vsel %vm106, %v52, 0
    %v117 = vsel %vm106, %v53, 0
    %v120 = vsel %vm106, %v54, 0
    %v123 = vsel %vm106, %v55, 0
    %v126 = vsel %vm106, %v56, 0
    %v129 = vsel %vm106, %v57, 0
    %v132 = vsel %vm106, %v34, 0
    %v135 = vsel %vm106, %v35, 0
    %v138 = vsel %vm106, %v36, 0
    %v141 = vsel %vm106, %v37, 0
    %v144 = vsel %vm106, %v38, 0
    %v147 = vsel %vm106, %v39, 0
    %v150 = vsel %vm106, %v40, 0
    %v153 = vsel %vm106, %v41, 0
    %v156 = vsel %vm106, %v42, 0
    %v159 = vsel %vm106, %v43, 0
    %v162 = vsel %vm106, %v44, 0
    %v165 = vsel %vm106, %v45, 0
    %v168 = vsel %vm106, %v46, 0
    %v171 = vsel %vm106, %v47, 0
    %v174 = vsel %vm106, %v48, 0
    %v177 = vsel %vm106, %v49, 0
    %179 = vmatprep.subr.mxu0 0.0
    %180 = vmatpush1.xpose.msra.mxu0 %v132
    %181 = vmatprep.subr.mxu0 0.0
    %182 = vmatpush1.xpose.msra.mxu0 %v135
    %183 = vmatprep.subr.mxu0 0.0
    %184 = vmatpush1.xpose.msra.mxu0 %v138
    %185 = vmatprep.subr.mxu0 0.0
    %186 = vmatpush1.xpose.msra.mxu0 %v141
    %187 = vmatprep.subr.mxu0 0.0
    %188 = vmatpush1.xpose.msra.mxu0 %v144
    %189 = vmatprep.subr.mxu0 0.0
    %190 = vmatpush1.xpose.msra.mxu0 %v147
    %191 = vmatprep.subr.mxu0 0.0
    %192 = vmatpush1.xpose.msra.mxu0 %v150
    %193 = vmatprep.subr.mxu0 0.0
    %194 = vmatpush1.xpose.msra.mxu0 %v153
    %195 = vmatprep.subr.mxu0 0.0
    %196 = vmatpush1.xpose.msra.mxu0 %v156
    %197 = vmatprep.subr.mxu0 0.0
    %198 = vmatpush1.xpose.msra.mxu0 %v159
    %199 = vmatprep.subr.mxu0 0.0
    %200 = vmatpush1.xpose.msra.mxu0 %v162
    %201 = vmatprep.subr.mxu0 0.0
    %202 = vmatpush1.xpose.msra.mxu0 %v165
    %203 = vmatprep.subr.mxu0 0.0
    %204 = vmatpush1.xpose.msra.mxu0 %v168
    %205 = vmatprep.subr.mxu0 0.0
    %206 = vmatpush1.xpose.msra.mxu0 %v171
    %207 = vmatprep.subr.mxu0 0.0
    %208 = vmatpush1.xpose.msra.mxu0 %v174
    %209 = vmatprep.subr.mxu0 0.0
    %210 = vmatpush1.xpose.msra.mxu0 %v177
    %211 = vmatprep.subr.mxu0 0.0
    %212 = vmatpush1.xpose.msra.mxu0 0.0
    %213 = vmatprep.subr.mxu0 0.0
    %214 = vmatpush1.xpose.msra.mxu0 0.0
    %215 = vmatprep.subr.mxu0 0.0
    %216 = vmatpush1.xpose.msra.mxu0 0.0
    %217 = vmatprep.subr.mxu0 0.0
    %218 = vmatpush1.xpose.msra.mxu0 0.0
    %219 = vmatprep.subr.mxu0 0.0
    %220 = vmatpush1.xpose.msra.mxu0 0.0
    %221 = vmatprep.subr.mxu0 0.0
    %222 = vmatpush1.xpose.msra.mxu0 0.0
    %223 = vmatprep.subr.mxu0 0.0
    %224 = vmatpush1.xpose.msra.mxu0 0.0
    %225 = vmatprep.subr.mxu0 0.0
    %226 = vmatpush1.xpose.msra.mxu0 0.0
    %227 = vmatprep.subr.mxu0 0.0
    %228 = vmatpush1.xpose.msra.mxu0 0.0
    %229 = vmatprep.subr.mxu0 0.0
    %230 = vmatpush1.xpose.msra.mxu0 0.0
    %231 = vmatprep.subr.mxu0 0.0
    %232 = vmatpush1.xpose.msra.mxu0 0.0
    %233 = vmatprep.subr.mxu0 0.0
    %234 = vmatpush1.xpose.msra.mxu0 0.0
    %235 = vmatprep.subr.mxu0 0.0
    %236 = vmatpush1.xpose.msra.mxu0 0.0
    %237 = vmatprep.subr.mxu0 0.0
    %238 = vmatpush1.xpose.msra.mxu0 0.0
    %239 = vmatprep.subr.mxu0 0.0
    %240 = vmatpush1.xpose.msra.mxu0 0.0
    %241 = vmatprep.subr.mxu0 0.0
    %242 = vmatpush1.xpose.msra.mxu0 0.0
    %243 = vmatprep.mubr.f32.mxu0 0.0
    %244 = vmatmul.mubr.f32.gmra.mrb[0].mxu0 %v108
    %v245 = vpop.f32.mrb[0].mxu0
    %v246 = vadd.f32 %v69, %v245
    %v247 = vpop.f32.mrb[0].mxu0
    %248 = vmatprep.mubr.f32.mxu0 0.0
    %249 = vmatmul.mubr.f32.gmra.mrb[0].mxu0 %v111
    %v250 = vpop.f32.mrb[0].mxu0
    %v251 = vadd.f32 %v74, %v250
    %v252 = vpop.f32.mrb[0].mxu0
    %253 = vmatprep.mubr.f32.mxu0 0.0
    %254 = vmatmul.mubr.f32.gmra.mrb[0].mxu0 %v114
    %v255 = vpop.f32.mrb[0].mxu0
    %v256 = vadd.f32 %v79, %v255
    %v257 = vpop.f32.mrb[0].mxu0
    %258 = vmatprep.mubr.f32.mxu0 0.0
    %259 = vmatmul.mubr.f32.gmra.mrb[0].mxu0 %v117
    %v260 = vpop.f32.mrb[0].mxu0
    %v261 = vadd.f32 %v84, %v260
    %v262 = vpop.f32.mrb[0].mxu0
    %263 = vmatprep.mubr.f32.mxu0 0.0
    %264 = vmatmul.mubr.f32.gmra.mrb[0].mxu0 %v120
    %v265 = vpop.f32.mrb[0].mxu0
    %v266 = vadd.f32 %v89, %v265
    %v267 = vpop.f32.mrb[0].mxu0
    %268 = vmatprep.mubr.f32.mxu0 0.0
    %269 = vmatmul.mubr.f32.gmra.mrb[0].mxu0 %v123
    %v270 = vpop.f32.mrb[0].mxu0
    %v271 = vadd.f32 %v94, %v270
    %v272 = vpop.f32.mrb[0].mxu0
    %273 = vmatprep.mubr.f32.mxu0 0.0
    %274 = vmatmul.mubr.f32.gmra.mrb[0].mxu0 %v126
    %v275 = vpop.f32.mrb[0].mxu0
    %v276 = vadd.f32 %v99, %v275
    %v277 = vpop.f32.mrb[0].mxu0
    %278 = vmatprep.mubr.f32.mxu0 0.0
    %279 = vmatmul.mubr.f32.gmra.mrb[0].mxu0 %v129
    %v280 = vpop.f32.mrb[0].mxu0
    %v281 = vadd.f32 %v104, %v280
    %v282 = vpop.f32.mrb[0].mxu0
    %283 = vdwg.mxu0
    %v284 = vmin.f32 %v246, 0.0
    %v285 = vmin.f32 %v251, 0.0
    %v286 = vmin.f32 %v256, 0.0
    %v287 = vmin.f32 %v261, 0.0
    %v288 = vmin.f32 %v266, 0.0
    %v289 = vmin.f32 %v271, 0.0
    %v290 = vmin.f32 %v276, 0.0
    %v291 = vmin.f32 %v281, 0.0
    %v292 = vmul.f32 %v284, 0.5
    %v293 = vmul.f32 %v285, 0.5
    %v294 = vmul.f32 %v286, 0.5
    %v295 = vmul.f32 %v287, 0.5
    %v296 = vmul.f32 %v288, 0.5
    %v297 = vmul.f32 %v289, 0.5
    %v298 = vmul.f32 %v290, 0.5
    %v299 = vmul.f32 %v291, 0.5
    %v300 = vtanh.pop %v292
    %v301 = vtanh.pop %v293
    %v302 = vtanh.pop %v294
    %v303 = vtanh.pop %v295
    %v304 = vtanh.pop %v296
    %v305 = vtanh.pop %v297
    %v306 = vtanh.pop %v298
    %v307 = vtanh.pop %v299
    %v308 = vmul.f32 %v284, 1.442695
    %v309 = vpow.pop %v308
    %v310 = vmul.f32 %v285, 1.442695
    %v311 = vpow.pop %v310
    %v312 = vmul.f32 %v286, 1.442695
    %v313 = vpow.pop %v312
    %v314 = vmul.f32 %v287, 1.442695
    %v315 = vpow.pop %v314
    %v316 = vmul.f32 %v288, 1.442695
    %v317 = vpow.pop %v316
    %v318 = vmul.f32 %v289, 1.442695
    %v319 = vpow.pop %v318
    %v320 = vmul.f32 %v290, 1.442695
    %v321 = vpow.pop %v320
    %v322 = vmul.f32 %v291, 1.442695
    %v323 = vpow.pop %v322
    %v324 = vadd.f32 %v309, 1.0
    %v325 = vadd.f32 %v311, 1.0
    %v326 = vadd.f32 %v313, 1.0
    %v327 = vadd.f32 %v315, 1.0
    %v328 = vadd.f32 %v317, 1.0
    %v329 = vadd.f32 %v319, 1.0
    %v330 = vadd.f32 %v321, 1.0
    %v331 = vadd.f32 %v323, 1.0
    %v332 = vmul.f32 %v300, %v324
    %v333 = vmul.f32 %v301, %v325
    %v334 = vmul.f32 %v302, %v326
    %v335 = vmul.f32 %v303, %v327
    %v336 = vmul.f32 %v304, %v328
    %v337 = vmul.f32 %v305, %v329
    %v338 = vmul.f32 %v306, %v330
    %v339 = vmul.f32 %v307, %v331
    %vm340 = vcmp.gt.f32.partialorder %v246, 0.0
    %vm341 = vcmp.gt.f32.partialorder %v251, 0.0
    %vm342 = vcmp.gt.f32.partialorder %v256, 0.0
    %vm343 = vcmp.gt.f32.partialorder %v261, 0.0
    %vm344 = vcmp.gt.f32.partialorder %v266, 0.0
    %vm345 = vcmp.gt.f32.partialorder %v271, 0.0
    %vm346 = vcmp.gt.f32.partialorder %v276, 0.0
    %vm347 = vcmp.gt.f32.partialorder %v281, 0.0
    %v348 = vsel %vm340, %v246, %v332
    %v349 = vsel %vm341, %v251, %v333
    %v350 = vsel %vm342, %v256, %v334
    %v351 = vsel %vm343, %v261, %v335
    %v352 = vsel %vm344, %v266, %v336
    %v353 = vsel %vm345, %v271, %v337
    %v354 = vsel %vm346, %v276, %v338
    %v355 = vsel %vm347, %v281, %v339
    %v356 = vld [vmem:[%s4] sm:$0xff]
    %v357 = vld [vmem:[%s4 + $0x8] sm:$0xff]
    %v358 = vld [vmem:[%s4 + $0x10] sm:$0xff]
    %v359 = vld [vmem:[%s4 + $0x18] sm:$0xff]
    %v360 = vld [vmem:[%s1] sm:$0xff]
    %v361 = vld [vmem:[%s1 + $0x8] sm:$0xff]
    %v362 = vld [vmem:[%s1 + $0x10] sm:$0xff]
    %v363 = vld [vmem:[%s1 + $0x18] sm:$0xff]
    %v364 = vld [vmem:[%s1 + $0x20] sm:$0xff]
    %v365 = vld [vmem:[%s1 + $0x28] sm:$0xff]
    %v366 = vld [vmem:[%s1 + $0x30] sm:$0xff]
    %v367 = vld [vmem:[%s1 + $0x38] sm:$0xff]
    %v368 = vld [vmem:[%s1 + $0x40] sm:$0xff]
    %v369 = vld [vmem:[%s1 + $0x48] sm:$0xff]
    %v370 = vld [vmem:[%s1 + $0x50] sm:$0xff]
    %v371 = vld [vmem:[%s1 + $0x58] sm:$0xff]
    %v372 = vld [vmem:[%s1 + $0x60] sm:$0xff]
    %v373 = vld [vmem:[%s1 + $0x68] sm:$0xff]
    %v374 = vld [vmem:[%s1 + $0x70] sm:$0xff]
    %v375 = vld [vmem:[%s1 + $0x78] sm:$0xff]
    %v376 = vld [vmem:[%s5] sm:$0xff]
    %v377 = vld [vmem:[%s5 + $0x8] sm:$0xff]
    %v378 = vld [vmem:[%s5 + $0x10] sm:$0xff]
    %v379 = vld [vmem:[%s5 + $0x18] sm:$0xff]
    %vm380 = vcmask 31744
    %v382 = vsel %vm380, %v376, 0
    %v385 = vsel %vm380, %v377, 0
    %v388 = vsel %vm380, %v378, 0
    %v391 = vsel %vm380, %v379, 0
    %v394 = vsel %vm380, %v360, 0
    %v397 = vsel %vm380, %v361, 0
    %v400 = vsel %vm380, %v362, 0
    %v403 = vsel %vm380, %v363, 0
    %v406 = vsel %vm380, %v364, 0
    %v409 = vsel %vm380, %v365, 0
    %v412 = vsel %vm380, %v366, 0
    %v415 = vsel %vm380, %v367, 0
    %v418 = vsel %vm380, %v368, 0
    %v421 = vsel %vm380, %v369, 0
    %v424 = vsel %vm380, %v370, 0
    %v427 = vsel %vm380, %v371, 0
    %v430 = vsel %vm380, %v372, 0
    %v433 = vsel %vm380, %v373, 0
    %v436 = vsel %vm380, %v374, 0
    %v439 = vsel %vm380, %v375, 0
    %441 = vmatprep.subr.mxu0 0.0
    %442 = vmatpush1.xpose.msra.mxu0 %v394
    %443 = vmatprep.subr.mxu0 0.0
    %444 = vmatpush1.xpose.msra.mxu0 %v397
    %445 = vmatprep.subr.mxu0 0.0
    %446 = vmatpush1.xpose.msra.mxu0 %v400
    %447 = vmatprep.subr.mxu0 0.0
    %448 = vmatpush1.xpose.msra.mxu0 %v403
    %449 = vmatprep.subr.mxu0 0.0
    %450 = vmatpush1.xpose.msra.mxu0 %v406
    %451 = vmatprep.subr.mxu0 0.0
    %452 = vmatpush1.xpose.msra.mxu0 %v409
    %453 = vmatprep.subr.mxu0 0.0
    %454 = vmatpush1.xpose.msra.mxu0 %v412
    %455 = vmatprep.subr.mxu0 0.0
    %456 = vmatpush1.xpose.msra.mxu0 %v415
    %457 = vmatprep.subr.mxu0 0.0
    %458 = vmatpush1.xpose.msra.mxu0 %v418
    %459 = vmatprep.subr.mxu0 0.0
    %460 = vmatpush1.xpose.msra.mxu0 %v421
    %461 = vmatprep.subr.mxu0 0.0
    %462 = vmatpush1.xpose.msra.mxu0 %v424
    %463 = vmatprep.subr.mxu0 0.0
    %464 = vmatpush1.xpose.msra.mxu0 %v427
    %465 = vmatprep.subr.mxu0 0.0
    %466 = vmatpush1.xpose.msra.mxu0 %v430
    %467 = vmatprep.subr.mxu0 0.0
    %468 = vmatpush1.xpose.msra.mxu0 %v433
    %469 = vmatprep.subr.mxu0 0.0
    %470 = vmatpush1.xpose.msra.mxu0 %v436
    %471 = vmatprep.subr.mxu0 0.0
    %472 = vmatpush1.xpose.msra.mxu0 %v439
    %473 = vmatprep.subr.mxu0 0.0
    %474 = vmatpush1.xpose.msra.mxu0 0.0
    %475 = vmatprep.subr.mxu0 0.0
    %476 = vmatpush1.xpose.msra.mxu0 0.0
    %477 = vmatprep.subr.mxu0 0.0
    %478 = vmatpush1.xpose.msra.mxu0 0.0
    %479 = vmatprep.subr.mxu0 0.0
    %480 = vmatpush1.xpose.msra.mxu0 0.0
    %481 = vmatprep.subr.mxu0 0.0
    %482 = vmatpush1.xpose.msra.mxu0 0.0
    %483 = vmatprep.subr.mxu0 0.0
    %484 = vmatpush1.xpose.msra.mxu0 0.0
    %485 = vmatprep.subr.mxu0 0.0
    %486 = vmatpush1.xpose.msra.mxu0 0.0
    %487 = vmatprep.subr.mxu0 0.0
    %488 = vmatpush1.xpose.msra.mxu0 0.0
    %489 = vmatprep.subr.mxu0 0.0
    %490 = vmatpush1.xpose.msra.mxu0 0.0
    %491 = vmatprep.subr.mxu0 0.0
    %492 = vmatpush1.xpose.msra.mxu0 0.0
    %493 = vmatprep.subr.mxu0 0.0
    %494 = vmatpush1.xpose.msra.mxu0 0.0
    %495 = vmatprep.subr.mxu0 0.0
    %496 = vmatpush1.xpose.msra.mxu0 0.0
    %497 = vmatprep.subr.mxu0 0.0
    %498 = vmatpush1.xpose.msra.mxu0 0.0
    %499 = vmatprep.subr.mxu0 0.0
    %500 = vmatpush1.xpose.msra.mxu0 0.0
    %501 = vmatprep.subr.mxu0 0.0
    %502 = vmatpush1.xpose.msra.mxu0 0.0
    %503 = vmatprep.subr.mxu0 0.0
    %504 = vmatpush1.xpose.msra.mxu0 0.0
    %505 = vmatprep.mubr.f32.mxu0 0.0
    %506 = vmatmul.mubr.f32.gmra.mrb[0].mxu0 %v382
    %v507 = vpop.f32.mrb[0].mxu0
    %v508 = vadd.f32 0.0, %v507
    %v509 = vpop.f32.mrb[0].mxu0
    %510 = vmatprep.mubr.f32.mxu0 0.0
    %511 = vmatmul.mubr.f32.gmra.mrb[0].mxu0 %v385
    %v512 = vpop.f32.mrb[0].mxu0
    %v513 = vadd.f32 0.0, %v512
    %v514 = vpop.f32.mrb[0].mxu0
    %515 = vmatprep.mubr.f32.mxu0 0.0
    %516 = vmatmul.mubr.f32.gmra.mrb[0].mxu0 %v388
    %v517 = vpop.f32.mrb[0].mxu0
    %v518 = vadd.f32 0.0, %v517
    %v519 = vpop.f32.mrb[0].mxu0
    %520 = vmatprep.mubr.f32.mxu0 0.0
    %521 = vmatmul.mubr.f32.gmra.mrb[0].mxu0 %v391
    %v522 = vpop.f32.mrb[0].mxu0
    %v523 = vadd.f32 0.0, %v522
    %v524 = vpop.f32.mrb[0].mxu0
    %525 = vdwg.mxu0
    %vm526 = vcmask 523264
    %v528 = vsel %vm526, %v356, 0
    %v531 = vsel %vm526, %v357, 0
    %v534 = vsel %vm526, %v358, 0
    %v537 = vsel %vm526, %v359, 0
    %539 = vmatprep.subr.mxu0 0.0
    %540 = vmatpush1.msra.mxu0 %v348
    %541 = vmatprep.subr.mxu0 0.0
    %542 = vmatpush1.msra.mxu0 %v349
    %543 = vmatprep.subr.mxu0 0.0
    %544 = vmatpush1.msra.mxu0 %v350
    %545 = vmatprep.subr.mxu0 0.0
    %546 = vmatpush1.msra.mxu0 %v351
    %547 = vmatprep.subr.mxu0 0.0
    %548 = vmatpush1.msra.mxu0 %v352
    %549 = vmatprep.subr.mxu0 0.0
    %550 = vmatpush1.msra.mxu0 %v353
    %551 = vmatprep.subr.mxu0 0.0
    %552 = vmatpush1.msra.mxu0 %v354
    %553 = vmatprep.subr.mxu0 0.0
    %554 = vmatpush1.msra.mxu0 %v355
    %555 = vmatprep.subr.mxu0 0.0
    %556 = vmatpush1.msra.mxu0 0.0
    %557 = vmatprep.subr.mxu0 0.0
    %558 = vmatpush1.msra.mxu0 0.0
    %559 = vmatprep.subr.mxu0 0.0
    %560 = vmatpush1.msra.mxu0 0.0
    %561 = vmatprep.subr.mxu0 0.0
    %562 = vmatpush1.msra.mxu0 0.0
    %563 = vmatprep.subr.mxu0 0.0
    %564 = vmatpush1.msra.mxu0 0.0
    %565 = vmatprep.subr.mxu0 0.0
    %566 = vmatpush1.msra.mxu0 0.0
    %567 = vmatprep.subr.mxu0 0.0
    %568 = vmatpush1.msra.mxu0 0.0
    %569 = vmatprep.subr.mxu0 0.0
    %570 = vmatpush1.msra.mxu0 0.0
    %571 = vmatprep.subr.mxu0 0.0
    %572 = vmatpush1.msra.mxu0 0.0
    %573 = vmatprep.subr.mxu0 0.0
    %574 = vmatpush1.msra.mxu0 0.0
    %575 = vmatprep.subr.mxu0 0.0
    %576 = vmatpush1.msra.mxu0 0.0
    %577 = vmatprep.subr.mxu0 0.0
    %578 = vmatpush1.msra.mxu0 0.0
    %579 = vmatprep.subr.mxu0 0.0
    %580 = vmatpush1.msra.mxu0 0.0
    %581 = vmatprep.subr.mxu0 0.0
    %582 = vmatpush1.msra.mxu0 0.0
    %583 = vmatprep.subr.mxu0 0.0
    %584 = vmatpush1.msra.mxu0 0.0
    %585 = vmatprep.subr.mxu0 0.0
    %586 = vmatpush1.msra.mxu0 0.0
    %587 = vmatprep.subr.mxu0 0.0
    %588 = vmatpush1.msra.mxu0 0.0
    %589 = vmatprep.subr.mxu0 0.0
    %590 = vmatpush1.msra.mxu0 0.0
    %591 = vmatprep.subr.mxu0 0.0
    %592 = vmatpush1.msra.mxu0 0.0
    %593 = vmatprep.subr.mxu0 0.0
    %594 = vmatpush1.msra.mxu0 0.0
    %595 = vmatprep.subr.mxu0 0.0
    %596 = vmatpush1.msra.mxu0 0.0
    %597 = vmatprep.subr.mxu0 0.0
    %598 = vmatpush1.msra.mxu0 0.0
    %599 = vmatprep.subr.mxu0 0.0
    %600 = vmatpush1.msra.mxu0 0.0
    %601 = vmatprep.subr.mxu0 0.0
    %602 = vmatpush1.msra.mxu0 0.0
    %603 = vmatprep.mubr.f32.mxu0 0.0
    %604 = vmatmul.mubr.f32.gmra.mrb[0].mxu0 %v528
    %v605 = vpop.f32.mrb[0].mxu0
    %v606 = vadd.f32 %v508, %v605
    %v607 = vpop.f32.mrb[0].mxu0
    %608 = vmatprep.mubr.f32.mxu0 0.0
    %609 = vmatmul.mubr.f32.gmra.mrb[0].mxu0 %v531
    %v610 = vpop.f32.mrb[0].mxu0
    %v611 = vadd.f32 %v513, %v610
    %v612 = vpop.f32.mrb[0].mxu0
    %613 = vmatprep.mubr.f32.mxu0 0.0
    %614 = vmatmul.mubr.f32.gmra.mrb[0].mxu0 %v534
    %v615 = vpop.f32.mrb[0].mxu0
    %v616 = vadd.f32 %v518, %v615
    %v617 = vpop.f32.mrb[0].mxu0
    %618 = vmatprep.mubr.f32.mxu0 0.0
    %619 = vmatmul.mubr.f32.gmra.mrb[0].mxu0 %v537
    %v620 = vpop.f32.mrb[0].mxu0
    %v621 = vadd.f32 %v523, %v620
    %v622 = vpop.f32.mrb[0].mxu0
    %623 = vdwg.mxu0
    %v624 = vld [vmem:[%s6] sm:$0xff]
    %v625 = vld [vmem:[%s6 + $0x8] sm:$0xff]
    %v626 = vld [vmem:[%s6 + $0x10] sm:$0xff]
    %v627 = vld [vmem:[%s6 + $0x18] sm:$0xff]
    %629 = vset.pattern.permute.xlu0 0
    %630 = vperm.xlu0 %629, %v624
    %v631 = vpop.permute.xlu0 %630
    %634 = vset.pattern.permute.xlu0 0
    %635 = vperm.xlu0 %634, %v625
    %v636 = vpop.permute.xlu0 %635
    %639 = vset.pattern.permute.xlu0 0
    %640 = vperm.xlu0 %639, %v626
    %v641 = vpop.permute.xlu0 %640
    %644 = vset.pattern.permute.xlu0 0
    %645 = vperm.xlu0 %644, %v627
    %v646 = vpop.permute.xlu0 %645
    %v648 = vadd.f32 %v606, %v631
    %v649 = vadd.f32 %v611, %v636
    %v650 = vadd.f32 %v616, %v641
    %v651 = vadd.f32 %v621, %v646
    %v652 = vmin.f32 %v648, 0.0
    %v653 = vmin.f32 %v649, 0.0
    %v654 = vmin.f32 %v650, 0.0
    %v655 = vmin.f32 %v651, 0.0
    %v656 = vmul.f32 %v652, 0.5
    %v657 = vmul.f32 %v653, 0.5
    %v658 = vmul.f32 %v654, 0.5
    %v659 = vmul.f32 %v655, 0.5
    %v660 = vtanh.pop %v656
    %v661 = vtanh.pop %v657
    %v662 = vtanh.pop %v658
    %v663 = vtanh.pop %v659
    %v664 = vmul.f32 %v652, 1.442695
    %v665 = vpow.pop %v664
    %v666 = vmul.f32 %v653, 1.442695
    %v667 = vpow.pop %v666
    %v668 = vmul.f32 %v654, 1.442695
    %v669 = vpow.pop %v668
    %v670 = vmul.f32 %v655, 1.442695
    %v671 = vpow.pop %v670
    %v672 = vadd.f32 %v665, 1.0
    %v673 = vadd.f32 %v667, 1.0
    %v674 = vadd.f32 %v669, 1.0
    %v675 = vadd.f32 %v671, 1.0
    %v676 = vmul.f32 %v660, %v672
    %v677 = vmul.f32 %v661, %v673
    %v678 = vmul.f32 %v662, %v674
    %v679 = vmul.f32 %v663, %v675
    %vm680 = vcmp.gt.f32.partialorder %v648, 0.0
    %vm681 = vcmp.gt.f32.partialorder %v649, 0.0
    %vm682 = vcmp.gt.f32.partialorder %v650, 0.0
    %vm683 = vcmp.gt.f32.partialorder %v651, 0.0
    %v684 = vsel %vm680, %v648, %v676
    %v685 = vsel %vm681, %v649, %v677
    %v686 = vsel %vm682, %v650, %v678
    %v687 = vsel %vm683, %v651, %v679
    %v688 = vld [vmem:[%s7] sm:$0xff]
    %v689 = vld [vmem:[%s7 + $0x8] sm:$0xff]
    %v690 = vld [vmem:[%s7 + $0x10] sm:$0xff]
    %v691 = vld [vmem:[%s7 + $0x18] sm:$0xff]
    %693 = vset.pattern.permute.xlu0 0
    %694 = vperm.xlu0 %693, %v688
    %v695 = vpop.permute.xlu0 %694
    %698 = vset.pattern.permute.xlu0 0
    %699 = vperm.xlu0 %698, %v689
    %v700 = vpop.permute.xlu0 %699
    %703 = vset.pattern.permute.xlu0 0
    %704 = vperm.xlu0 %703, %v690
    %v705 = vpop.permute.xlu0 %704
    %708 = vset.pattern.permute.xlu0 0
    %709 = vperm.xlu0 %708, %v691
    %v710 = vpop.permute.xlu0 %709
    %v712 = vmul.f32 %v684, %v695
    %v713 = vmul.f32 %v685, %v700
    %v714 = vmul.f32 %v686, %v705
    %v715 = vmul.f32 %v687, %v710
    %v716 = vadd.f32 %v712, %v713
    %v717 = vadd.f32 %v716, %v714
    %v718 = vadd.f32 %v717, %v715
    %v719 = vrot.slane %v718, 4
    %v720 = vadd.f32 %v718, %v719
    %v721 = vrot.slane %v720, 2
    %v722 = vadd.f32 %v720, %v721
    %v723 = vrot.slane %v722, 1
    %v724 = vadd.f32 %v722, %v723
    %s725 = sld [smem:[#allocation2]]
    %v726 = vstv %s725
    %v727 = vadd.f32 %v724, %v726
    %728 = vst [vmem:[#allocation3] sm:$0x1] %v727
    // Predicated region
    $region38: #{tpu_custom_call.1} parent=1 // pred_check
      _
    $region39: #{tpu_custom_call.1} parent=1 // pred_check_branch
      %730 = sbr.rel (0) target = $region41
    $region40: #{tpu_custom_call.1} parent=1 // pred_region
      %s732 = ssub.s32 16, 16
      %733 = vsyncadd [#allocation4], %s732
      %s735 = sshll.u32 [#allocation3], 4
      %s736 = int_to_ptr.vmem [resolvable:$true] %s735
      %738 = dma.vmem_to_hbm [thread:$0]  %s736, 16, %s9, [#allocation4]
    $region41: #{tpu_custom_call.1} parent=1 // pred_fallthru
      _
    // Predicated region
    $region42: #{tpu_custom_call.1} parent=1 // pred_check
      _
    $region43: #{tpu_custom_call.1} parent=1 // pred_check_branch
      %740 = sbr.rel (0) target = $region45
    $region44: #{tpu_custom_call.1} parent=1 // pred_region
      %741 = dma.done [#allocation4], 16
    $region45: #{tpu_custom_call.1} parent=1 // pred_fallthru
      _
    %742 = vsyncpa [#allocation4], 1

</llo_original>
